<compile_context>
chip_gen: v5e
topology: v5e:2x2
jax: 0.10.0
libtpu: 0.0.40
codegen_flags: <defaults>
</compile_context>

<pallas_src>
import math

import jax
import jax.numpy as jnp
from jax.experimental import pallas as pl
from jax.experimental.pallas import tpu as pltpu

_LANE = 128  # vreg lane width


def make_positional_encoding(d_model: int, max_len: int) -> jnp.ndarray:
    """Deterministic pe table, identical to the PyTorch __init__ math (even d_model)."""
    position = jnp.arange(0, max_len, dtype=jnp.float32)[:, None]            # (max_len, 1)
    div_term = jnp.exp(
        jnp.arange(0, d_model, 2, dtype=jnp.float32) * (-math.log(10000.0) / d_model)
    )                                                                         # (d_model//2,)
    angles = position * div_term                                              # (max_len, d_model//2)
    pe = jnp.zeros((max_len, d_model), dtype=jnp.float32)
    pe = pe.at[:, 0::2].set(jnp.sin(angles))
    pe = pe.at[:, 1::2].set(jnp.cos(angles))
    return pe                                                                 # (max_len, d_model)


def _add_pe_kernel(x_ref, pe_ref, o_ref):
    # x_ref / o_ref: (TB, TR, C) tiles; pe_ref: (1, TR, C) — broadcasts over batch.
    o_ref[...] = (x_ref[...] + pe_ref[...]).astype(o_ref.dtype)


def _choose_tiles(B, R, C, itemsize, target_block_bytes):
    """Pick (TB, TR): block (TB, TR, C) is ~target_block_bytes and sublane-aligned."""
    sub = max(8, 32 // itemsize)              # sublane packing: 8 f32, 16 bf16, 32 int8
    row_bytes = C * itemsize
    rows_budget = max(1, target_block_bytes // row_bytes)
    if rows_budget >= R:
        # Whole row extent fits: pack multiple batches per block (amortizes per-step
        # overhead; collapses small problems to a single grid step).
        TR = R
        TB = min(B, max(1, target_block_bytes // (R * row_bytes)))
    else:
        TR = min(R, max(sub, (rows_budget // sub) * sub))   # multiple of sub, or full R
        TB = 1
    return TB, TR


def positional_encoding_forward(
    x: jnp.ndarray,
    pe: jnp.ndarray,
    *,
    target_block_bytes: int = 2 * 1024 * 1024,   # <=2 MiB/operand keeps v5e's 16 MiB scoped VMEM happy
) -> jnp.ndarray:
    """x: (B, S, D), pe: (max_len, D).  Returns x + pe[:S] broadcast over batch."""
    B, S, D = x.shape
    itemsize = jnp.dtype(x.dtype).itemsize

    # Static slice (matches self.pe[:, :x.size(1), :]) + cast so the add and pe's
    # HBM traffic stay in x's dtype.
    # TODO(synk): PyTorch would promote a bf16 x to f32 (pe is f32); we keep x.dtype
    # on purpose for bandwidth — flip the cast direction if exact torch promotion is needed.
    pe_slice = pe[:S, :].astype(x.dtype)

    # ---- layout: lane-dense view when free, otherwise keep (B, S, D) -------
    L = S * D
    if L % _LANE == 0:
        # Free trailing-dim reshape -> every store is a full, unmasked 128-lane store.
        R, C = L // _LANE, _LANE
        x3 = x.reshape(B, R, C)
        p3 = pe_slice.reshape(1, R, C)
    else:
        # Unaligned S*D: full-extent D as the last block dim (allowed by the BlockSpec
        # rule).  A few masked tail stores beat the pad + slice HBM round trips.
        R, C = S, D
        x3 = x
        p3 = pe_slice.reshape(1, S, D)

    TB, TR = _choose_tiles(B, R, C, itemsize, target_block_bytes)

    # Batch is the innermost (fastest-varying) grid axis; pe's block index is
    # independent of it, so its DMA is issued once per row tile, not once per (t, b).
    grid = (pl.cdiv(R, TR), pl.cdiv(B, TB))

    bytes_accessed = (2 * B * R * C + R * C) * itemsize   # x read + out write + pe read
    out3 = pl.pallas_call(
        _add_pe_kernel,
        out_shape=jax.ShapeDtypeStruct((B, R, C), x.dtype),
        grid_spec=pltpu.PrefetchScalarGridSpec(
            num_scalar_prefetch=0,
            grid=grid,
            in_specs=[
                pl.BlockSpec((TB, TR, C), lambda t, b: (b, t, 0)),
                pl.BlockSpec((1, TR, C), lambda t, b: (0, t, 0)),
            ],
            out_specs=pl.BlockSpec((TB, TR, C), lambda t, b: (b, t, 0)),
        ),
        compiler_params=pltpu.CompilerParams(
            dimension_semantics=("parallel", "parallel"),
        ),
        cost_estimate=pl.CostEstimate(
            flops=B * R * C, transcendentals=0, bytes_accessed=bytes_accessed),
    )(x3, p3)

    return out3.reshape(B, S, D)   # free reshape (no-op on the unaligned path)


if __name__ == "__main__":
    # Small shapes consistent with the module: batch=2, seq=8, d_model=32, max_len=64.
    B, S, D, MAX_LEN = 2, 8, 32, 64

    key = jax.random.PRNGKey(0)
    x = jax.random.normal(key, (B, S, D), dtype=jnp.float32)
    pe = make_positional_encoding(d_model=D, max_len=MAX_LEN)

    out = jax.block_until_ready(positional_encoding_forward(x, pe))
    ref = x + pe[None, :S, :]
    assert out.shape == (B, S, D)
    assert jnp.allclose(out, ref, atol=1e-6, rtol=1e-6)

    # Multi-tile lane-dense path: tiny block budget forces grid=(2, 2) over R=15 rows
    # with a ragged row tail and batch-inner pe reuse.
    S2, D2 = 40, 48   # S2*D2 = 1920 = 15 * 128
    x2 = jax.random.normal(jax.random.PRNGKey(1), (B, S2, D2), dtype=jnp.float32)
    pe2 = make_positional_encoding(d_model=D2, max_len=64)
    out2 = jax.block_until_ready(
        positional_encoding_forward(x2, pe2, target_block_bytes=8 * _LANE * 4)
    )
    assert jnp.allclose(out2, x2 + pe2[None, :S2, :], atol=1e-6, rtol=1e-6)

    # Non-128-aligned S*D with bf16 input: exercises the (B, S, D) fallback path
    # (no padding round trips) and the explicit dtype cast on the store.
    S3, D3 = 9, 24    # S3*D3 = 216, not a multiple of 128
    x3 = jax.random.normal(jax.random.PRNGKey(2), (B, S3, D3), dtype=jnp.bfloat16)
    pe3 = make_positional_encoding(d_model=D3, max_len=64)
    out3 = jax.block_until_ready(positional_encoding_forward(x3, pe3))
    ref3 = x3 + pe3[None, :S3, :].astype(jnp.bfloat16)
    assert jnp.allclose(out3.astype(jnp.float32), ref3.astype(jnp.float32),
                        atol=1e-2, rtol=1e-2)

    # Fallback path with row tiling (S split across grid steps, ragged tail).
    S4, D4 = 40, 24   # S4*D4 = 960, not a multiple of 128
    x4 = jax.random.normal(jax.random.PRNGKey(3), (B, S4, D4), dtype=jnp.float32)
    pe4 = make_positional_encoding(d_model=D4, max_len=64)
    out4 = jax.block_until_ready(
        positional_encoding_forward(x4, pe4, target_block_bytes=8 * D4 * 4)
    )
    assert jnp.allclose(out4, x4 + pe4[None, :S4, :], atol=1e-6, rtol=1e-6)

    print("KERNEL_OK")
</pallas_src>

<mosaic_0001>
module attributes {stable_mosaic.version = 11 : i64} {
  func.func @_add_pe_kernel(%arg0: i32, %arg1: i32, %arg2: memref<2x2x128xf32, #tpu.memory_space<vmem>>, %arg3: memref<1x2x128xf32, #tpu.memory_space<vmem>>, %arg4: memref<2x2x128xf32, #tpu.memory_space<vmem>>) attributes {dimension_semantics = [#tpu.dimension_semantics<parallel>, #tpu.dimension_semantics<parallel>], iteration_bounds = array<i64: 1, 1>, scalar_prefetch = 0 : i64, scratch_operands = 0 : i64, tpu.core_type = #tpu.core_type<tc>, window_params = [{transform_indices = @transform_0, window_bounds = array<i64: 2, 2, 128>}, {transform_indices = @transform_1, window_bounds = array<i64: 1, 2, 128>}, {transform_indices = @transform_2, window_bounds = array<i64: 2, 2, 128>}]} {
    %c0 = arith.constant 0 : index
    %c0_0 = arith.constant 0 : index
    %c0_1 = arith.constant 0 : index
    %0 = vector.load %arg2[%c0, %c0_0, %c0_1] : memref<2x2x128xf32, #tpu.memory_space<vmem>>, vector<2x2x128xf32>
    %c0_2 = arith.constant 0 : index
    %c0_3 = arith.constant 0 : index
    %c0_4 = arith.constant 0 : index
    %1 = vector.load %arg3[%c0_2, %c0_3, %c0_4] : memref<1x2x128xf32, #tpu.memory_space<vmem>>, vector<1x2x128xf32>
    %2 = vector.broadcast %1 : vector<1x2x128xf32> to vector<2x2x128xf32>
    %3 = arith.addf %0, %2 : vector<2x2x128xf32>
    %c0_5 = arith.constant 0 : index
    %c0_6 = arith.constant 0 : index
    %c0_7 = arith.constant 0 : index
    %4 = vector.load %arg4[%c0_5, %c0_6, %c0_7] : memref<2x2x128xf32, #tpu.memory_space<vmem>>, vector<2x2x128xf32>
    tpu.vector_store %arg4[%c0_5, %c0_6, %c0_7], %3 {strides = array<i32>} : memref<2x2x128xf32, #tpu.memory_space<vmem>>, vector<2x2x128xf32>,
    return
  }
  func.func @transform_0(%arg0: i32, %arg1: i32) -> (i32, i32, i32) {
    %c0_i32 = arith.constant 0 : i32
    %c0_i32_0 = arith.constant 0 : i32
    return %arg1, %arg0, %c0_i32 : i32, i32, i32
  }
  func.func @transform_1(%arg0: i32, %arg1: i32) -> (i32, i32, i32) {
    %c0_i32 = arith.constant 0 : i32
    %c0_i32_0 = arith.constant 0 : i32
    %c0_i32_1 = arith.constant 0 : i32
    return %c0_i32, %arg0, %c0_i32_0 : i32, i32, i32
  }
  func.func @transform_2(%arg0: i32, %arg1: i32) -> (i32, i32, i32) {
    %c0_i32 = arith.constant 0 : i32
    %c0_i32_0 = arith.constant 0 : i32
    return %arg1, %arg0, %c0_i32 : i32, i32, i32
  }
}

</mosaic_0001>

<llo_original>
// kernel: tpu_custom_call.1
$region0: #{tpu_custom_call.1}
  #allocation0 [shape = 'u32[]', space=smem, size = 0x4, offset = 0x4, fixed_abs, tag = 'smem constant byte address 0x4 - core index']
  #allocation1 [shape = 'u32[72,128]{1,0:T(1,128)}', space=vmem, size = 0x9000, scoped, tag = 'internal scratch']
  %s0 = inlined_call_operand.hbm [shape: f32[2,2,128], index: 0, kind: input, shape index: {}]
  %s1 = inlined_call_operand.hbm [shape: f32[1,2,128], index: 1, kind: input, shape index: {}]
  %s2 = inlined_call_operand.hbm [shape: f32[2,2,128], index: 2, kind: output, shape index: {}]
  %s3 = sld [smem:[#allocation0]]
  $region26: #{tpu_custom_call.1} parent=0
    _
  %s5 = ssub.s32 1, %s3
  %s6 = scalar_select 0, %s5, %s3
  $region1: #{tpu_custom_call.1} parent=0
    #allocation2 [shape = 'u8[2048]{0}', space=vmem, size = 0x800, scoped, tag = 'input window, operand 0, single buffered']
    #allocation3 [shape = 's32[1]{0}', space=sflag, size = 0x4, scoped, tag = 'scoped memory for tpu_custom_call.1']
    #allocation4 [shape = 's32[1]{0}', space=sflag, size = 0x4, scoped, tag = 'scoped memory for tpu_custom_call.1']
    #allocation5 [shape = 'u8[1024]{0}', space=vmem, size = 0x400, scoped, tag = 'input window, operand 1, single buffered']
    #allocation6 [shape = 's32[1]{0}', space=sflag, size = 0x4, scoped, tag = 'scoped memory for tpu_custom_call.1']
    #allocation7 [shape = 'u8[2048]{0}', space=vmem, size = 0x800, scoped, tag = 'output window, operand 0, single buffered']
    %7 = vsyncpa [#allocation3], 0
    %8 = vsyncpa [#allocation6], 0
    %9 = vsyncpa [#allocation4], 0
    // Predicated region
    $region2: #{tpu_custom_call.1} parent=1 // pred_check
      _
    $region3: #{tpu_custom_call.1} parent=1 // pred_check_branch
      %11 = sbr.rel (0) target = $region5
    $region4: #{tpu_custom_call.1} parent=1 // pred_region
      %13 = vsyncadd [#allocation3], 0
      %s14 = sshll.u32 %s0, 4
      %s15 = int_to_ptr.hbm [resolvable:$true] %s14
      %s16 = sshll.u32 [#allocation2], 4
      %s17 = int_to_ptr.vmem [resolvable:$true] %s16
      %22 = dma.hbm_to_vmem [thread:$0]  %s15, 64, %s17, [#allocation3], 32, 32, 2
    $region5: #{tpu_custom_call.1} parent=1 // pred_fallthru
      _
    // Predicated region
    $region6: #{tpu_custom_call.1} parent=1 // pred_check
      _
    $region7: #{tpu_custom_call.1} parent=1 // pred_check_branch
      %24 = sbr.rel (0) target = $region9
    $region8: #{tpu_custom_call.1} parent=1 // pred_region
      %26 = vsyncadd [#allocation6], 0
      %s28 = sshll.u32 %s1, 4
      %s29 = int_to_ptr.hbm [resolvable:$true] %s28
      %s30 = sshll.u32 [#allocation5], 4
      %s31 = int_to_ptr.vmem [resolvable:$true] %s30
      %33 = dma.hbm_to_vmem [thread:$0]  %s29, 32, %s31, [#allocation6]
    $region9: #{tpu_custom_call.1} parent=1 // pred_fallthru
      _
    // Predicated region
    $region10: #{tpu_custom_call.1} parent=1 // pred_check
      _
    $region11: #{tpu_custom_call.1} parent=1 // pred_check_branch
      %35 = sbr.rel (0) target = $region13
    $region12: #{tpu_custom_call.1} parent=1 // pred_region
      %37 = dma.done [#allocation3], 64
    $region13: #{tpu_custom_call.1} parent=1 // pred_fallthru
      _
    // Predicated region
    $region14: #{tpu_custom_call.1} parent=1 // pred_check
      _
    $region15: #{tpu_custom_call.1} parent=1 // pred_check_branch
      %39 = sbr.rel (0) target = $region17
    $region16: #{tpu_custom_call.1} parent=1 // pred_region
      %41 = dma.done [#allocation6], 32
    $region17: #{tpu_custom_call.1} parent=1 // pred_fallthru
      _
    %v42 = vld [vmem:[#allocation2] sm:$0x3]
    %v43 = vld [vmem:[#allocation2 + $0x2] sm:$0x3]
    %v44 = vld [vmem:[#allocation5] sm:$0x3]
    %v45 = vadd.f32 %v42, %v44
    %v46 = vadd.f32 %v43, %v44
    %47 = vst [vmem:[#allocation7] sm:$0x3] %v45
    %48 = vst [vmem:[#allocation7 + $0x2] sm:$0x3] %v46
    // Predicated region
    $region18: #{tpu_custom_call.1} parent=1 // pred_check
      _
    $region19: #{tpu_custom_call.1} parent=1 // pred_check_branch
      %50 = sbr.rel (0) target = $region21
    $region20: #{tpu_custom_call.1} parent=1 // pred_region
      %52 = vsyncadd [#allocation4], 0
      %s53 = sshll.u32 [#allocation7], 4
      %s54 = int_to_ptr.vmem [resolvable:$true] %s53
      %s55 = sshll.u32 %s2, 4
      %s56 = int_to_ptr.hbm [resolvable:$true] %s55
      %61 = dma.vmem_to_hbm [thread:$0]  %s54, 64, %s56, [#allocation4], 32, 32, 2
    $region21: #{tpu_custom_call.1} parent=1 // pred_fallthru
      _
    // Predicated region
    $region22: #{tpu_custom_call.1} parent=1 // pred_check
      _
    $region23: #{tpu_custom_call.1} parent=1 // pred_check_branch
      %63 = sbr.rel (0) target = $region25
    $region24: #{tpu_custom_call.1} parent=1 // pred_region
      %65 = dma.done [#allocation4], 64
    $region25: #{tpu_custom_call.1} parent=1 // pred_fallthru
      _
    %66 = vsyncpa [#allocation3], 1
    %67 = vsyncpa [#allocation6], 1
    %68 = vsyncpa [#allocation4], 1

</llo_original>
